<compile_context>
chip_gen: v7x
topology: tpu7x:2x2x1
jax: 0.10.0
libtpu: 0.0.40
codegen_flags: <defaults>
</compile_context>

<pallas_src>
import jax
import jax.numpy as jnp
from jax import lax
from jax.experimental import pallas as pl
from jax.experimental.pallas import tpu as pltpu


def lstm_chunk_kernel(xg_ref, whh_ref, out_ref, h_sc, c_sc):
    # xg_ref:  (T, B, 4H)  precomputed input gates (x @ W_ih^T + b_ih + b_hh) for this chunk
    # whh_ref: (H, 4H)     hidden->gates weight (transposed), constant across grid
    # out_ref: (T, B, H)   hidden states for this chunk
    # h_sc/c_sc: (B, H) f32 scratch, persistent across grid iterations (sequential grid)
    chunk = pl.program_id(0)

    @pl.when(chunk == 0)
    def _():
        h_sc[...] = jnp.zeros_like(h_sc)
        c_sc[...] = jnp.zeros_like(c_sc)

    T = xg_ref.shape[0]
    H = h_sc.shape[-1]

    whh = whh_ref[...]          # hoist weight load out of the unrolled loop
    h = h_sc[...]
    c = c_sc[...]

    hs = []
    for t in range(T):          # static unroll over the time chunk; h/c stay in vregs
        gates = xg_ref[t] + jnp.dot(h, whh, preferred_element_type=jnp.float32)  # (B, 4H)
        # PyTorch gate order: i, f, g, o
        i_g = jax.nn.sigmoid(gates[:, 0 * H:1 * H])
        f_g = jax.nn.sigmoid(gates[:, 1 * H:2 * H])
        g_g = jnp.tanh(gates[:, 2 * H:3 * H])
        o_g = jax.nn.sigmoid(gates[:, 3 * H:4 * H])
        c = f_g * c + i_g * g_g
        h = o_g * jnp.tanh(c)
        hs.append(h)

    h_sc[...] = h
    c_sc[...] = c
    # Single lane-dense-ish store for the whole chunk instead of T small masked stores.
    out_ref[...] = jnp.stack(hs, axis=0).astype(out_ref.dtype)


def lstm_encoder_pallas(tokens, embedding, w_ih, w_hh, b_ih, b_hh, *, time_chunk=8):
    """tokens: (S, B) int32; embedding: (V, E); w_ih: (4H, E); w_hh: (4H, H); biases (4H,)."""
    S, B = tokens.shape
    H = w_hh.shape[1]
    G = 4 * H

    # Hoisted input projection: embedding lookup fused with x @ W_ih^T (+ combined bias)
    # as a (V, 4H) table; per-token contribution becomes a pure gather (glue, plain JAX).
    proj_table = embedding @ w_ih.T + (b_ih + b_hh)        # (V, 4H)
    x_gates = jnp.take(proj_table, tokens, axis=0)         # (S, B, 4H) float32

    whh_t = jnp.transpose(w_hh)                            # (H, 4H)

    # Pad the sequence to a multiple of the time chunk (padded steps are discarded).
    T = time_chunk
    n_chunks = pl.cdiv(S, T)
    S_pad = n_chunks * T
    if S_pad != S:
        x_gates = jnp.pad(x_gates, ((0, S_pad - S), (0, 0), (0, 0)))

    out = pl.pallas_call(
        lstm_chunk_kernel,
        out_shape=jax.ShapeDtypeStruct((S_pad, B, H), jnp.float32),
        grid_spec=pltpu.PrefetchScalarGridSpec(
            num_scalar_prefetch=0,
            grid=(n_chunks,),
            in_specs=[
                pl.BlockSpec((T, B, G), lambda c: (c, 0, 0)),
                pl.BlockSpec((H, G), lambda c: (0, 0)),   # constant -> fetched once
            ],
            out_specs=pl.BlockSpec((T, B, H), lambda c: (c, 0, 0)),
            scratch_shapes=[
                pltpu.VMEM((B, H), jnp.float32),  # h
                pltpu.VMEM((B, H), jnp.float32),  # c
            ],
        ),
        compiler_params=pltpu.CompilerParams(
            dimension_semantics=("arbitrary",),   # recurrence is serial over time chunks
        ),
    )(x_gates, whh_t)
    return out[:S]


def lstm_encoder_reference(tokens, embedding, w_ih, w_hh, b_ih, b_hh):
    """Pure-JAX reference mirroring torch.nn.Embedding + torch.nn.LSTM semantics."""
    emb = jnp.take(embedding, tokens, axis=0)  # (S, B, E)
    H = w_hh.shape[1]
    B = tokens.shape[1]

    def step(carry, x_t):
        h, c = carry
        gates = x_t @ w_ih.T + b_ih + h @ w_hh.T + b_hh
        i_g = jax.nn.sigmoid(gates[:, 0 * H:1 * H])
        f_g = jax.nn.sigmoid(gates[:, 1 * H:2 * H])
        g_g = jnp.tanh(gates[:, 2 * H:3 * H])
        o_g = jax.nn.sigmoid(gates[:, 3 * H:4 * H])
        c_new = f_g * c + i_g * g_g
        h_new = o_g * jnp.tanh(c_new)
        return (h_new, c_new), h_new

    init = (jnp.zeros((B, H), jnp.float32), jnp.zeros((B, H), jnp.float32))
    _, outs = lax.scan(step, init, emb)
    return outs


if __name__ == "__main__":
    # Small, deterministic configuration.
    vocab_size = 50
    embedding_dim = 16
    hidden_dim = 32
    seq_len = 8
    batch = 2

    key = jax.random.PRNGKey(0)
    k_tok, k_emb, k_wih, k_whh, k_bih, k_bhh = jax.random.split(key, 6)

    tokens = jax.random.randint(k_tok, (seq_len, batch), 0, vocab_size, dtype=jnp.int32)

    # Embedding ~ N(0,1) like nn.Embedding default; LSTM params uniform(-1/sqrt(H), 1/sqrt(H)).
    embedding = jax.random.normal(k_emb, (vocab_size, embedding_dim), dtype=jnp.float32)
    bound = 1.0 / jnp.sqrt(jnp.float32(hidden_dim))
    w_ih = jax.random.uniform(k_wih, (4 * hidden_dim, embedding_dim), jnp.float32, -bound, bound)
    w_hh = jax.random.uniform(k_whh, (4 * hidden_dim, hidden_dim), jnp.float32, -bound, bound)
    b_ih = jax.random.uniform(k_bih, (4 * hidden_dim,), jnp.float32, -bound, bound)
    b_hh = jax.random.uniform(k_bhh, (4 * hidden_dim,), jnp.float32, -bound, bound)

    out = lstm_encoder_pallas(tokens, embedding, w_ih, w_hh, b_ih, b_hh, time_chunk=8)
    out = jax.block_until_ready(out)

    ref = lstm_encoder_reference(tokens, embedding, w_ih, w_hh, b_ih, b_hh)
    assert out.shape == (seq_len, batch, hidden_dim)
    assert jnp.allclose(out, ref, atol=1e-5, rtol=1e-5), "mismatch vs pure-JAX LSTM reference"

    # TODO(synk): bidirectional / num_layers>1 variants not implemented (module defaults used).
    print("KERNEL_OK")
</pallas_src>

<mosaic_0001>
module attributes {stable_mosaic.version = 11 : i64} {
  func.func @lstm_chunk_kernel(%arg0: i32, %arg1: memref<8x2x128xf32, #tpu.memory_space<vmem>>, %arg2: memref<32x128xf32, #tpu.memory_space<vmem>>, %arg3: memref<8x2x32xf32, #tpu.memory_space<vmem>>, %arg4: memref<2x32xf32, #tpu.memory_space<vmem>>, %arg5: memref<2x32xf32, #tpu.memory_space<vmem>>) attributes {dimension_semantics = [#tpu.dimension_semantics<arbitrary>], iteration_bounds = array<i64: 1>, scalar_prefetch = 0 : i64, scratch_operands = 2 : i64, tpu.core_type = #tpu.core_type<tc>, window_params = [{transform_indices = @transform_0, window_bounds = array<i64: 8, 2, 128>}, {pipeline_mode = #tpu.pipeline_mode<synchronous>, transform_indices = @transform_1, window_bounds = array<i64: 32, 128>}, {transform_indices = @transform_2, window_bounds = array<i64: 8, 2, 32>}]} {
    %c0_i32 = arith.constant 0 : i32
    %0 = arith.cmpi eq, %arg0, %c0_i32 : i32
    %1 = arith.extui %0 : i1 to i32
    %c0_i32_0 = arith.constant 0 : i32
    %2 = arith.cmpi ne, %1, %c0_i32_0 : i32
    scf.if %2 {
      %cst_61 = arith.constant 0.000000e+00 : f32
      %250 = vector.broadcast %cst_61 : f32 to vector<2x32xf32>
      %c0_62 = arith.constant 0 : index
      %c0_63 = arith.constant 0 : index
      %251 = vector.load %arg4[%c0_62, %c0_63] : memref<2x32xf32, #tpu.memory_space<vmem>>, vector<2x32xf32>
      tpu.vector_store %arg4[%c0_62, %c0_63], %250 {strides = array<i32>} : memref<2x32xf32, #tpu.memory_space<vmem>>, vector<2x32xf32>,
      %cst_64 = arith.constant 0.000000e+00 : f32
      %252 = vector.broadcast %cst_64 : f32 to vector<2x32xf32>
      %c0_65 = arith.constant 0 : index
      %c0_66 = arith.constant 0 : index
      %253 = vector.load %arg5[%c0_65, %c0_66] : memref<2x32xf32, #tpu.memory_space<vmem>>, vector<2x32xf32>
      tpu.vector_store %arg5[%c0_65, %c0_66], %252 {strides = array<i32>} : memref<2x32xf32, #tpu.memory_space<vmem>>, vector<2x32xf32>,
    } else {
    }
    %c0 = arith.constant 0 : index
    %c0_1 = arith.constant 0 : index
    %3 = vector.load %arg2[%c0, %c0_1] : memref<32x128xf32, #tpu.memory_space<vmem>>, vector<32x128xf32>
    %c0_2 = arith.constant 0 : index
    %c0_3 = arith.constant 0 : index
    %4 = vector.load %arg4[%c0_2, %c0_3] : memref<2x32xf32, #tpu.memory_space<vmem>>, vector<2x32xf32>
    %c0_4 = arith.constant 0 : index
    %c0_5 = arith.constant 0 : index
    %5 = vector.load %arg5[%c0_4, %c0_5] : memref<2x32xf32, #tpu.memory_space<vmem>>, vector<2x32xf32>
    %c0_6 = arith.constant 0 : index
    %c0_7 = arith.constant 0 : index
    %c0_8 = arith.constant 0 : index
    %6 = vector.load %arg1[%c0_6, %c0_7, %c0_8] : memref<8x2x128xf32, #tpu.memory_space<vmem>>, vector<1x2x128xf32>
    %7 = vector.shape_cast %6 : vector<1x2x128xf32> to vector<2x128xf32>
    %cst = arith.constant dense<0.000000e+00> : vector<2x128xf32>
    %8 = tpu.matmul %4, %3, %cst {dimension_numbers = #tpu.dot_dimension_numbers<[1], [0], [0], [1], [0, 0, 1, 1], [], []>} : vector<2x32xf32>, vector<32x128xf32>, vector<2x128xf32> -> vector<2x128xf32>
    %9 = arith.addf %7, %8 : vector<2x128xf32>
    %10 = vector.extract_strided_slice %9 {offsets = [0, 0], sizes = [2, 32], strides = [1, 1]} : vector<2x128xf32> to vector<2x32xf32>
    %11 = arith.negf %10 : vector<2x32xf32>
    %12 = math.exp %11 : vector<2x32xf32>
    %cst_9 = arith.constant 1.000000e+00 : f32
    %13 = vector.broadcast %cst_9 : f32 to vector<2x32xf32>
    %14 = arith.addf %13, %12 : vector<2x32xf32>
    %15 = arith.divf %13, %14 : vector<2x32xf32>
    %16 = vector.extract_strided_slice %9 {offsets = [0, 32], sizes = [2, 32], strides = [1, 1]} : vector<2x128xf32> to vector<2x32xf32>
    %17 = arith.negf %16 : vector<2x32xf32>
    %18 = math.exp %17 : vector<2x32xf32>
    %cst_10 = arith.constant 1.000000e+00 : f32
    %19 = vector.broadcast %cst_10 : f32 to vector<2x32xf32>
    %20 = arith.addf %19, %18 : vector<2x32xf32>
    %21 = arith.divf %19, %20 : vector<2x32xf32>
    %22 = vector.extract_strided_slice %9 {offsets = [0, 64], sizes = [2, 32], strides = [1, 1]} : vector<2x128xf32> to vector<2x32xf32>
    %23 = math.tanh %22 : vector<2x32xf32>
    %24 = vector.extract_strided_slice %9 {offsets = [0, 96], sizes = [2, 32], strides = [1, 1]} : vector<2x128xf32> to vector<2x32xf32>
    %25 = arith.negf %24 : vector<2x32xf32>
    %26 = math.exp %25 : vector<2x32xf32>
    %cst_11 = arith.constant 1.000000e+00 : f32
    %27 = vector.broadcast %cst_11 : f32 to vector<2x32xf32>
    %28 = arith.addf %27, %26 : vector<2x32xf32>
    %29 = arith.divf %27, %28 : vector<2x32xf32>
    %30 = arith.mulf %21, %5 : vector<2x32xf32>
    %31 = arith.mulf %15, %23 : vector<2x32xf32>
    %32 = arith.addf %30, %31 : vector<2x32xf32>
    %33 = math.tanh %32 : vector<2x32xf32>
    %34 = arith.mulf %29, %33 : vector<2x32xf32>
    %c1 = arith.constant 1 : index
    %c0_12 = arith.constant 0 : index
    %c0_13 = arith.constant 0 : index
    %35 = vector.load %arg1[%c1, %c0_12, %c0_13] : memref<8x2x128xf32, #tpu.memory_space<vmem>>, vector<1x2x128xf32>
    %36 = vector.shape_cast %35 : vector<1x2x128xf32> to vector<2x128xf32>
    %cst_14 = arith.constant dense<0.000000e+00> : vector<2x128xf32>
    %37 = tpu.matmul %34, %3, %cst_14 {dimension_numbers = #tpu.dot_dimension_numbers<[1], [0], [0], [1], [0, 0, 1, 1], [], []>} : vector<2x32xf32>, vector<32x128xf32>, vector<2x128xf32> -> vector<2x128xf32>
    %38 = arith.addf %36, %37 : vector<2x128xf32>
    %39 = vector.extract_strided_slice %38 {offsets = [0, 0], sizes = [2, 32], strides = [1, 1]} : vector<2x128xf32> to vector<2x32xf32>
    %40 = arith.negf %39 : vector<2x32xf32>
    %41 = math.exp %40 : vector<2x32xf32>
    %cst_15 = arith.constant 1.000000e+00 : f32
    %42 = vector.broadcast %cst_15 : f32 to vector<2x32xf32>
    %43 = arith.addf %42, %41 : vector<2x32xf32>
    %44 = arith.divf %42, %43 : vector<2x32xf32>
    %45 = vector.extract_strided_slice %38 {offsets = [0, 32], sizes = [2, 32], strides = [1, 1]} : vector<2x128xf32> to vector<2x32xf32>
    %46 = arith.negf %45 : vector<2x32xf32>
    %47 = math.exp %46 : vector<2x32xf32>
    %cst_16 = arith.constant 1.000000e+00 : f32
    %48 = vector.broadcast %cst_16 : f32 to vector<2x32xf32>
    %49 = arith.addf %48, %47 : vector<2x32xf32>
    %50 = arith.divf %48, %49 : vector<2x32xf32>
    %51 = vector.extract_strided_slice %38 {offsets = [0, 64], sizes = [2, 32], strides = [1, 1]} : vector<2x128xf32> to vector<2x32xf32>
    %52 = math.tanh %51 : vector<2x32xf32>
    %53 = vector.extract_strided_slice %38 {offsets = [0, 96], sizes = [2, 32], strides = [1, 1]} : vector<2x128xf32> to vector<2x32xf32>
    %54 = arith.negf %53 : vector<2x32xf32>
    %55 = math.exp %54 : vector<2x32xf32>
    %cst_17 = arith.constant 1.000000e+00 : f32
    %56 = vector.broadcast %cst_17 : f32 to vector<2x32xf32>
    %57 = arith.addf %56, %55 : vector<2x32xf32>
    %58 = arith.divf %56, %57 : vector<2x32xf32>
    %59 = arith.mulf %50, %32 : vector<2x32xf32>
    %60 = arith.mulf %44, %52 : vector<2x32xf32>
    %61 = arith.addf %59, %60 : vector<2x32xf32>
    %62 = math.tanh %61 : vector<2x32xf32>
    %63 = arith.mulf %58, %62 : vector<2x32xf32>
    %c2 = arith.constant 2 : index
    %c0_18 = arith.constant 0 : index
    %c0_19 = arith.constant 0 : index
    %64 = vector.load %arg1[%c2, %c0_18, %c0_19] : memref<8x2x128xf32, #tpu.memory_space<vmem>>, vector<1x2x128xf32>
    %65 = vector.shape_cast %64 : vector<1x2x128xf32> to vector<2x128xf32>
    %cst_20 = arith.constant dense<0.000000e+00> : vector<2x128xf32>
    %66 = tpu.matmul %63, %3, %cst_20 {dimension_numbers = #tpu.dot_dimension_numbers<[1], [0], [0], [1], [0, 0, 1, 1], [], []>} : vector<2x32xf32>, vector<32x128xf32>, vector<2x128xf32> -> vector<2x128xf32>
    %67 = arith.addf %65, %66 : vector<2x128xf32>
    %68 = vector.extract_strided_slice %67 {offsets = [0, 0], sizes = [2, 32], strides = [1, 1]} : vector<2x128xf32> to vector<2x32xf32>
    %69 = arith.negf %68 : vector<2x32xf32>
    %70 = math.exp %69 : vector<2x32xf32>
    %cst_21 = arith.constant 1.000000e+00 : f32
    %71 = vector.broadcast %cst_21 : f32 to vector<2x32xf32>
    %72 = arith.addf %71, %70 : vector<2x32xf32>
    %73 = arith.divf %71, %72 : vector<2x32xf32>
    %74 = vector.extract_strided_slice %67 {offsets = [0, 32], sizes = [2, 32], strides = [1, 1]} : vector<2x128xf32> to vector<2x32xf32>
    %75 = arith.negf %74 : vector<2x32xf32>
    %76 = math.exp %75 : vector<2x32xf32>
    %cst_22 = arith.constant 1.000000e+00 : f32
    %77 = vector.broadcast %cst_22 : f32 to vector<2x32xf32>
    %78 = arith.addf %77, %76 : vector<2x32xf32>
    %79 = arith.divf %77, %78 : vector<2x32xf32>
    %80 = vector.extract_strided_slice %67 {offsets = [0, 64], sizes = [2, 32], strides = [1, 1]} : vector<2x128xf32> to vector<2x32xf32>
    %81 = math.tanh %80 : vector<2x32xf32>
    %82 = vector.extract_strided_slice %67 {offsets = [0, 96], sizes = [2, 32], strides = [1, 1]} : vector<2x128xf32> to vector<2x32xf32>
    %83 = arith.negf %82 : vector<2x32xf32>
    %84 = math.exp %83 : vector<2x32xf32>
    %cst_23 = arith.constant 1.000000e+00 : f32
    %85 = vector.broadcast %cst_23 : f32 to vector<2x32xf32>
    %86 = arith.addf %85, %84 : vector<2x32xf32>
    %87 = arith.divf %85, %86 : vector<2x32xf32>
    %88 = arith.mulf %79, %61 : vector<2x32xf32>
    %89 = arith.mulf %73, %81 : vector<2x32xf32>
    %90 = arith.addf %88, %89 : vector<2x32xf32>
    %91 = math.tanh %90 : vector<2x32xf32>
    %92 = arith.mulf %87, %91 : vector<2x32xf32>
    %c3 = arith.constant 3 : index
    %c0_24 = arith.constant 0 : index
    %c0_25 = arith.constant 0 : index
    %93 = vector.load %arg1[%c3, %c0_24, %c0_25] : memref<8x2x128xf32, #tpu.memory_space<vmem>>, vector<1x2x128xf32>
    %94 = vector.shape_cast %93 : vector<1x2x128xf32> to vector<2x128xf32>
    %cst_26 = arith.constant dense<0.000000e+00> : vector<2x128xf32>
    %95 = tpu.matmul %92, %3, %cst_26 {dimension_numbers = #tpu.dot_dimension_numbers<[1], [0], [0], [1], [0, 0, 1, 1], [], []>} : vector<2x32xf32>, vector<32x128xf32>, vector<2x128xf32> -> vector<2x128xf32>
    %96 = arith.addf %94, %95 : vector<2x128xf32>
    %97 = vector.extract_strided_slice %96 {offsets = [0, 0], sizes = [2, 32], strides = [1, 1]} : vector<2x128xf32> to vector<2x32xf32>
    %98 = arith.negf %97 : vector<2x32xf32>
    %99 = math.exp %98 : vector<2x32xf32>
    %cst_27 = arith.constant 1.000000e+00 : f32
    %100 = vector.broadcast %cst_27 : f32 to vector<2x32xf32>
    %101 = arith.addf %100, %99 : vector<2x32xf32>
    %102 = arith.divf %100, %101 : vector<2x32xf32>
    %103 = vector.extract_strided_slice %96 {offsets = [0, 32], sizes = [2, 32], strides = [1, 1]} : vector<2x128xf32> to vector<2x32xf32>
    %104 = arith.negf %103 : vector<2x32xf32>
    %105 = math.exp %104 : vector<2x32xf32>
    %cst_28 = arith.constant 1.000000e+00 : f32
    %106 = vector.broadcast %cst_28 : f32 to vector<2x32xf32>
    %107 = arith.addf %106, %105 : vector<2x32xf32>
    %108 = arith.divf %106, %107 : vector<2x32xf32>
    %109 = vector.extract_strided_slice %96 {offsets = [0, 64], sizes = [2, 32], strides = [1, 1]} : vector<2x128xf32> to vector<2x32xf32>
    %110 = math.tanh %109 : vector<2x32xf32>
    %111 = vector.extract_strided_slice %96 {offsets = [0, 96], sizes = [2, 32], strides = [1, 1]} : vector<2x128xf32> to vector<2x32xf32>
    %112 = arith.negf %111 : vector<2x32xf32>
    %113 = math.exp %112 : vector<2x32xf32>
    %cst_29 = arith.constant 1.000000e+00 : f32
    %114 = vector.broadcast %cst_29 : f32 to vector<2x32xf32>
    %115 = arith.addf %114, %113 : vector<2x32xf32>
    %116 = arith.divf %114, %115 : vector<2x32xf32>
    %117 = arith.mulf %108, %90 : vector<2x32xf32>
    %118 = arith.mulf %102, %110 : vector<2x32xf32>
    %119 = arith.addf %117, %118 : vector<2x32xf32>
    %120 = math.tanh %119 : vector<2x32xf32>
    %121 = arith.mulf %116, %120 : vector<2x32xf32>
    %c4 = arith.constant 4 : index
    %c0_30 = arith.constant 0 : index
    %c0_31 = arith.constant 0 : index
    %122 = vector.load %arg1[%c4, %c0_30, %c0_31] : memref<8x2x128xf32, #tpu.memory_space<vmem>>, vector<1x2x128xf32>
    %123 = vector.shape_cast %122 : vector<1x2x128xf32> to vector<2x128xf32>
    %cst_32 = arith.constant dense<0.000000e+00> : vector<2x128xf32>
    %124 = tpu.matmul %121, %3, %cst_32 {dimension_numbers = #tpu.dot_dimension_numbers<[1], [0], [0], [1], [0, 0, 1, 1], [], []>} : vector<2x32xf32>, vector<32x128xf32>, vector<2x128xf32> -> vector<2x128xf32>
    %125 = arith.addf %123, %124 : vector<2x128xf32>
    %126 = vector.extract_strided_slice %125 {offsets = [0, 0], sizes = [2, 32], strides = [1, 1]} : vector<2x128xf32> to vector<2x32xf32>
    %127 = arith.negf %126 : vector<2x32xf32>
    %128 = math.exp %127 : vector<2x32xf32>
    %cst_33 = arith.constant 1.000000e+00 : f32
    %129 = vector.broadcast %cst_33 : f32 to vector<2x32xf32>
    %130 = arith.addf %129, %128 : vector<2x32xf32>
    %131 = arith.divf %129, %130 : vector<2x32xf32>
    %132 = vector.extract_strided_slice %125 {offsets = [0, 32], sizes = [2, 32], strides = [1, 1]} : vector<2x128xf32> to vector<2x32xf32>
    %133 = arith.negf %132 : vector<2x32xf32>
    %134 = math.exp %133 : vector<2x32xf32>
    %cst_34 = arith.constant 1.000000e+00 : f32
    %135 = vector.broadcast %cst_34 : f32 to vector<2x32xf32>
    %136 = arith.addf %135, %134 : vector<2x32xf32>
    %137 = arith.divf %135, %136 : vector<2x32xf32>
    %138 = vector.extract_strided_slice %125 {offsets = [0, 64], sizes = [2, 32], strides = [1, 1]} : vector<2x128xf32> to vector<2x32xf32>
    %139 = math.tanh %138 : vector<2x32xf32>
    %140 = vector.extract_strided_slice %125 {offsets = [0, 96], sizes = [2, 32], strides = [1, 1]} : vector<2x128xf32> to vector<2x32xf32>
    %141 = arith.negf %140 : vector<2x32xf32>
    %142 = math.exp %141 : vector<2x32xf32>
    %cst_35 = arith.constant 1.000000e+00 : f32
    %143 = vector.broadcast %cst_35 : f32 to vector<2x32xf32>
    %144 = arith.addf %143, %142 : vector<2x32xf32>
    %145 = arith.divf %143, %144 : vector<2x32xf32>
    %146 = arith.mulf %137, %119 : vector<2x32xf32>
    %147 = arith.mulf %131, %139 : vector<2x32xf32>
    %148 = arith.addf %146, %147 : vector<2x32xf32>
    %149 = math.tanh %148 : vector<2x32xf32>
    %150 = arith.mulf %145, %149 : vector<2x32xf32>
    %c5 = arith.constant 5 : index
    %c0_36 = arith.constant 0 : index
    %c0_37 = arith.constant 0 : index
    %151 = vector.load %arg1[%c5, %c0_36, %c0_37] : memref<8x2x128xf32, #tpu.memory_space<vmem>>, vector<1x2x128xf32>
    %152 = vector.shape_cast %151 : vector<1x2x128xf32> to vector<2x128xf32>
    %cst_38 = arith.constant dense<0.000000e+00> : vector<2x128xf32>
    %153 = tpu.matmul %150, %3, %cst_38 {dimension_numbers = #tpu.dot_dimension_numbers<[1], [0], [0], [1], [0, 0, 1, 1], [], []>} : vector<2x32xf32>, vector<32x128xf32>, vector<2x128xf32> -> vector<2x128xf32>
    %154 = arith.addf %152, %153 : vector<2x128xf32>
    %155 = vector.extract_strided_slice %154 {offsets = [0, 0], sizes = [2, 32], strides = [1, 1]} : vector<2x128xf32> to vector<2x32xf32>
    %156 = arith.negf %155 : vector<2x32xf32>
    %157 = math.exp %156 : vector<2x32xf32>
    %cst_39 = arith.constant 1.000000e+00 : f32
    %158 = vector.broadcast %cst_39 : f32 to vector<2x32xf32>
    %159 = arith.addf %158, %157 : vector<2x32xf32>
    %160 = arith.divf %158, %159 : vector<2x32xf32>
    %161 = vector.extract_strided_slice %154 {offsets = [0, 32], sizes = [2, 32], strides = [1, 1]} : vector<2x128xf32> to vector<2x32xf32>
    %162 = arith.negf %161 : vector<2x32xf32>
    %163 = math.exp %162 : vector<2x32xf32>
    %cst_40 = arith.constant 1.000000e+00 : f32
    %164 = vector.broadcast %cst_40 : f32 to vector<2x32xf32>
    %165 = arith.addf %164, %163 : vector<2x32xf32>
    %166 = arith.divf %164, %165 : vector<2x32xf32>
    %167 = vector.extract_strided_slice %154 {offsets = [0, 64], sizes = [2, 32], strides = [1, 1]} : vector<2x128xf32> to vector<2x32xf32>
    %168 = math.tanh %167 : vector<2x32xf32>
    %169 = vector.extract_strided_slice %154 {offsets = [0, 96], sizes = [2, 32], strides = [1, 1]} : vector<2x128xf32> to vector<2x32xf32>
    %170 = arith.negf %169 : vector<2x32xf32>
    %171 = math.exp %170 : vector<2x32xf32>
    %cst_41 = arith.constant 1.000000e+00 : f32
    %172 = vector.broadcast %cst_41 : f32 to vector<2x32xf32>
    %173 = arith.addf %172, %171 : vector<2x32xf32>
    %174 = arith.divf %172, %173 : vector<2x32xf32>
    %175 = arith.mulf %166, %148 : vector<2x32xf32>
    %176 = arith.mulf %160, %168 : vector<2x32xf32>
    %177 = arith.addf %175, %176 : vector<2x32xf32>
    %178 = math.tanh %177 : vector<2x32xf32>
    %179 = arith.mulf %174, %178 : vector<2x32xf32>
    %c6 = arith.constant 6 : index
    %c0_42 = arith.constant 0 : index
    %c0_43 = arith.constant 0 : index
    %180 = vector.load %arg1[%c6, %c0_42, %c0_43] : memref<8x2x128xf32, #tpu.memory_space<vmem>>, vector<1x2x128xf32>
    %181 = vector.shape_cast %180 : vector<1x2x128xf32> to vector<2x128xf32>
    %cst_44 = arith.constant dense<0.000000e+00> : vector<2x128xf32>
    %182 = tpu.matmul %179, %3, %cst_44 {dimension_numbers = #tpu.dot_dimension_numbers<[1], [0], [0], [1], [0, 0, 1, 1], [], []>} : vector<2x32xf32>, vector<32x128xf32>, vector<2x128xf32> -> vector<2x128xf32>
    %183 = arith.addf %181, %182 : vector<2x128xf32>
    %184 = vector.extract_strided_slice %183 {offsets = [0, 0], sizes = [2, 32], strides = [1, 1]} : vector<2x128xf32> to vector<2x32xf32>
    %185 = arith.negf %184 : vector<2x32xf32>
    %186 = math.exp %185 : vector<2x32xf32>
    %cst_45 = arith.constant 1.000000e+00 : f32
    %187 = vector.broadcast %cst_45 : f32 to vector<2x32xf32>
    %188 = arith.addf %187, %186 : vector<2x32xf32>
    %189 = arith.divf %187, %188 : vector<2x32xf32>
    %190 = vector.extract_strided_slice %183 {offsets = [0, 32], sizes = [2, 32], strides = [1, 1]} : vector<2x128xf32> to vector<2x32xf32>
    %191 = arith.negf %190 : vector<2x32xf32>
    %192 = math.exp %191 : vector<2x32xf32>
    %cst_46 = arith.constant 1.000000e+00 : f32
    %193 = vector.broadcast %cst_46 : f32 to vector<2x32xf32>
    %194 = arith.addf %193, %192 : vector<2x32xf32>
    %195 = arith.divf %193, %194 : vector<2x32xf32>
    %196 = vector.extract_strided_slice %183 {offsets = [0, 64], sizes = [2, 32], strides = [1, 1]} : vector<2x128xf32> to vector<2x32xf32>
    %197 = math.tanh %196 : vector<2x32xf32>
    %198 = vector.extract_strided_slice %183 {offsets = [0, 96], sizes = [2, 32], strides = [1, 1]} : vector<2x128xf32> to vector<2x32xf32>
    %199 = arith.negf %198 : vector<2x32xf32>
    %200 = math.exp %199 : vector<2x32xf32>
    %cst_47 = arith.constant 1.000000e+00 : f32
    %201 = vector.broadcast %cst_47 : f32 to vector<2x32xf32>
    %202 = arith.addf %201, %200 : vector<2x32xf32>
    %203 = arith.divf %201, %202 : vector<2x32xf32>
    %204 = arith.mulf %195, %177 : vector<2x32xf32>
    %205 = arith.mulf %189, %197 : vector<2x32xf32>
    %206 = arith.addf %204, %205 : vector<2x32xf32>
    %207 = math.tanh %206 : vector<2x32xf32>
    %208 = arith.mulf %203, %207 : vector<2x32xf32>
    %c7 = arith.constant 7 : index
    %c0_48 = arith.constant 0 : index
    %c0_49 = arith.constant 0 : index
    %209 = vector.load %arg1[%c7, %c0_48, %c0_49] : memref<8x2x128xf32, #tpu.memory_space<vmem>>, vector<1x2x128xf32>
    %210 = vector.shape_cast %209 : vector<1x2x128xf32> to vector<2x128xf32>
    %cst_50 = arith.constant dense<0.000000e+00> : vector<2x128xf32>
    %211 = tpu.matmul %208, %3, %cst_50 {dimension_numbers = #tpu.dot_dimension_numbers<[1], [0], [0], [1], [0, 0, 1, 1], [], []>} : vector<2x32xf32>, vector<32x128xf32>, vector<2x128xf32> -> vector<2x128xf32>
    %212 = arith.addf %210, %211 : vector<2x128xf32>
    %213 = vector.extract_strided_slice %212 {offsets = [0, 0], sizes = [2, 32], strides = [1, 1]} : vector<2x128xf32> to vector<2x32xf32>
    %214 = arith.negf %213 : vector<2x32xf32>
    %215 = math.exp %214 : vector<2x32xf32>
    %cst_51 = arith.constant 1.000000e+00 : f32
    %216 = vector.broadcast %cst_51 : f32 to vector<2x32xf32>
    %217 = arith.addf %216, %215 : vector<2x32xf32>
    %218 = arith.divf %216, %217 : vector<2x32xf32>
    %219 = vector.extract_strided_slice %212 {offsets = [0, 32], sizes = [2, 32], strides = [1, 1]} : vector<2x128xf32> to vector<2x32xf32>
    %220 = arith.negf %219 : vector<2x32xf32>
    %221 = math.exp %220 : vector<2x32xf32>
    %cst_52 = arith.constant 1.000000e+00 : f32
    %222 = vector.broadcast %cst_52 : f32 to vector<2x32xf32>
    %223 = arith.addf %222, %221 : vector<2x32xf32>
    %224 = arith.divf %222, %223 : vector<2x32xf32>
    %225 = vector.extract_strided_slice %212 {offsets = [0, 64], sizes = [2, 32], strides = [1, 1]} : vector<2x128xf32> to vector<2x32xf32>
    %226 = math.tanh %225 : vector<2x32xf32>
    %227 = vector.extract_strided_slice %212 {offsets = [0, 96], sizes = [2, 32], strides = [1, 1]} : vector<2x128xf32> to vector<2x32xf32>
    %228 = arith.negf %227 : vector<2x32xf32>
    %229 = math.exp %228 : vector<2x32xf32>
    %cst_53 = arith.constant 1.000000e+00 : f32
    %230 = vector.broadcast %cst_53 : f32 to vector<2x32xf32>
    %231 = arith.addf %230, %229 : vector<2x32xf32>
    %232 = arith.divf %230, %231 : vector<2x32xf32>
    %233 = arith.mulf %224, %206 : vector<2x32xf32>
    %234 = arith.mulf %218, %226 : vector<2x32xf32>
    %235 = arith.addf %233, %234 : vector<2x32xf32>
    %236 = math.tanh %235 : vector<2x32xf32>
    %237 = arith.mulf %232, %236 : vector<2x32xf32>
    %c0_54 = arith.constant 0 : index
    %c0_55 = arith.constant 0 : index
    %238 = vector.load %arg4[%c0_54, %c0_55] : memref<2x32xf32, #tpu.memory_space<vmem>>, vector<2x32xf32>
    tpu.vector_store %arg4[%c0_54, %c0_55], %237 {strides = array<i32>} : memref<2x32xf32, #tpu.memory_space<vmem>>, vector<2x32xf32>,
    %c0_56 = arith.constant 0 : index
    %c0_57 = arith.constant 0 : index
    %239 = vector.load %arg5[%c0_56, %c0_57] : memref<2x32xf32, #tpu.memory_space<vmem>>, vector<2x32xf32>
    tpu.vector_store %arg5[%c0_56, %c0_57], %235 {strides = array<i32>} : memref<2x32xf32, #tpu.memory_space<vmem>>, vector<2x32xf32>,
    %240 = vector.shape_cast %34 : vector<2x32xf32> to vector<1x2x32xf32>
    %241 = vector.shape_cast %63 : vector<2x32xf32> to vector<1x2x32xf32>
    %242 = vector.shape_cast %92 : vector<2x32xf32> to vector<1x2x32xf32>
    %243 = vector.shape_cast %121 : vector<2x32xf32> to vector<1x2x32xf32>
    %244 = vector.shape_cast %150 : vector<2x32xf32> to vector<1x2x32xf32>
    %245 = vector.shape_cast %179 : vector<2x32xf32> to vector<1x2x32xf32>
    %246 = vector.shape_cast %208 : vector<2x32xf32> to vector<1x2x32xf32>
    %247 = vector.shape_cast %237 : vector<2x32xf32> to vector<1x2x32xf32>
    %248 = tpu.concatenate %240, %241, %242, %243, %244, %245, %246, %247 in 0 : vector<1x2x32xf32>, vector<1x2x32xf32>, vector<1x2x32xf32>, vector<1x2x32xf32>, vector<1x2x32xf32>, vector<1x2x32xf32>, vector<1x2x32xf32>, vector<1x2x32xf32> -> vector<8x2x32xf32>
    %c0_58 = arith.constant 0 : index
    %c0_59 = arith.constant 0 : index
    %c0_60 = arith.constant 0 : index
    %249 = vector.load %arg3[%c0_58, %c0_59, %c0_60] : memref<8x2x32xf32, #tpu.memory_space<vmem>>, vector<8x2x32xf32>
    tpu.vector_store %arg3[%c0_58, %c0_59, %c0_60], %248 {strides = array<i32>} : memref<8x2x32xf32, #tpu.memory_space<vmem>>, vector<8x2x32xf32>,
    return
  }
  func.func @transform_0(%arg0: i32) -> (i32, i32, i32) {
    %c0_i32 = arith.constant 0 : i32
    %c0_i32_0 = arith.constant 0 : i32
    %c0_i32_1 = arith.constant 0 : i32
    return %arg0, %c0_i32, %c0_i32_0 : i32, i32, i32
  }
  func.func @transform_1(%arg0: i32) -> (i32, i32) {
    %c0_i32 = arith.constant 0 : i32
    %c0_i32_0 = arith.constant 0 : i32
    %c0_i32_1 = arith.constant 0 : i32
    return %c0_i32, %c0_i32_0 : i32, i32
  }
  func.func @transform_2(%arg0: i32) -> (i32, i32, i32) {
    %c0_i32 = arith.constant 0 : i32
    %c0_i32_0 = arith.constant 0 : i32
    %c0_i32_1 = arith.constant 0 : i32
    return %arg0, %c0_i32, %c0_i32_0 : i32, i32, i32
  }
}

</mosaic_0001>

<llo_original>
// kernel: tpu_custom_call.1
$region0: #{tpu_custom_call.1}
  #allocation0 [shape = 'u32[]', space=smem, size = 0x4, offset = 0x4, fixed_abs, tag = 'smem constant byte address 0x4 - core index']
  #allocation1 [shape = 'u32[144,128]{1,0:T(1,128)}', space=vmem, size = 0x12000, scoped, tag = 'internal scratch']
  #allocation2 [shape = 'f32[2,32]{1,0:T(2,128)}', space=vmem, size = 0x400, scoped, tag = 'scratch operand']
  #allocation3 [shape = 'f32[2,32]{1,0:T(2,128)}', space=vmem, size = 0x400, scoped, tag = 'scratch operand']
  %s0 = inlined_call_operand.hbm [shape: f32[8,2,128], index: 0, kind: input, shape index: {}]
  %s1 = inlined_call_operand.hbm [shape: f32[32,128], index: 1, kind: input, shape index: {}]
  %s2 = inlined_call_operand.hbm [shape: f32[8,2,32], index: 2, kind: output, shape index: {}]
  %s3 = sld [smem:[#allocation0]]
  $region30: #{tpu_custom_call.1} parent=0
    _
  %s5 = ssub.s32 1, %s3
  %s6 = scalar_select 0, %s5, %s3
  $region1: #{tpu_custom_call.1} parent=0
    #allocation4 [shape = 'u8[8192]{0}', space=vmem, size = 0x2000, scoped, tag = 'input window, operand 0, single buffered']
    #allocation5 [shape = 's32[1]{0}', space=sflag, size = 0x4, scoped, tag = 'scoped memory for tpu_custom_call.1']
    #allocation6 [shape = 's32[1]{0}', space=sflag, size = 0x4, scoped, tag = 'scoped memory for tpu_custom_call.1']
    #allocation7 [shape = 'u8[16384]{0}', space=vmem, size = 0x4000, scoped, tag = 'input window, operand 1, single buffered']
    #allocation8 [shape = 's32[1]{0}', space=sflag, size = 0x4, scoped, tag = 'scoped memory for tpu_custom_call.1']
    #allocation9 [shape = 'u8[8192]{0}', space=vmem, size = 0x2000, scoped, tag = 'output window, operand 0, single buffered']
    %7 = vsyncpa [#allocation5], 0
    %8 = vsyncpa [#allocation8], 0
    %9 = vsyncpa [#allocation6], 0
    // Predicated region
    $region2: #{tpu_custom_call.1} parent=1 // pred_check
      _
    $region3: #{tpu_custom_call.1} parent=1 // pred_check_branch
      %11 = sbr.rel (0) target = $region5
    $region4: #{tpu_custom_call.1} parent=1 // pred_region
      %s13 = ssub.s32 256, 256
      %14 = vsyncadd [#allocation5], %s13
      %s15 = sshll.u32 [#allocation4], 4
      %s16 = int_to_ptr.vmem [resolvable:$true] %s15
      %21 = dma.hbm_to_vmem [thread:$0]  %s0, 256, %s16, [#allocation5], 32, 32, 2
    $region5: #{tpu_custom_call.1} parent=1 // pred_fallthru
      _
    // Predicated region
    $region6: #{tpu_custom_call.1} parent=1 // pred_check
      _
    $region7: #{tpu_custom_call.1} parent=1 // pred_check_branch
      %23 = sbr.rel (0) target = $region9
    $region8: #{tpu_custom_call.1} parent=1 // pred_region
      %s25 = ssub.s32 512, 512
      %26 = vsyncadd [#allocation8], %s25
      %s27 = sshll.u32 [#allocation7], 4
      %s28 = int_to_ptr.vmem [resolvable:$true] %s27
      %33 = dma.hbm_to_vmem [thread:$0]  %s1, 512, %s28, [#allocation8], 128, 128, 8
    $region9: #{tpu_custom_call.1} parent=1 // pred_fallthru
      _
    // Predicated region
    $region10: #{tpu_custom_call.1} parent=1 // pred_check
      _
    $region11: #{tpu_custom_call.1} parent=1 // pred_check_branch
      %35 = sbr.rel (0) target = $region13
    $region12: #{tpu_custom_call.1} parent=1 // pred_region
      %36 = dma.done [#allocation5], 256
    $region13: #{tpu_custom_call.1} parent=1 // pred_fallthru
      _
    // Predicated region
    $region14: #{tpu_custom_call.1} parent=1 // pred_check
      _
    $region15: #{tpu_custom_call.1} parent=1 // pred_check_branch
      %38 = sbr.rel (0) target = $region17
    $region16: #{tpu_custom_call.1} parent=1 // pred_region
      %39 = dma.done [#allocation8], 512
    $region17: #{tpu_custom_call.1} parent=1 // pred_fallthru
      _
    %p40 = scmp.eq.s32.totalorder 0, 0
    // Predicated region
    $region18: #{tpu_custom_call.1} parent=1 // pred_check
      %p41 = pneg %p40
    $region19: #{tpu_custom_call.1} parent=1 // pred_check_branch
      %43 = sbr.rel (%p41) target = $region21
    $region20: #{tpu_custom_call.1} parent=1 // pred_region
      %vm44 = vcmask 254976
      %45 = vst.msk [vmem:[#allocation2] sm:$0x3] %vm44, 0.0
      %46 = vst.msk [vmem:[#allocation3] sm:$0x3] %vm44, 0.0
    $region21: #{tpu_custom_call.1} parent=1 // pred_fallthru
      _
    %v47 = vld [vmem:[#allocation7] sm:$0xff]
    %v48 = vld [vmem:[#allocation7 + $0x8] sm:$0xff]
    %v49 = vld [vmem:[#allocation7 + $0x10] sm:$0xff]
    %v50 = vld [vmem:[#allocation7 + $0x18] sm:$0xff]
    %v51 = vld [vmem:[#allocation2] sm:$0x3]
    %v52 = vld [vmem:[#allocation3] sm:$0x3]
    %v53 = vld [vmem:[#allocation4] sm:$0x3]
    %vm54 = vcmask 261120
    %v56 = vsel %vm54, %v51, 0
    %58 = vmatprep.subr.mxu0 0.0
    %59 = vmatpush1.msra.mxu0 %v47
    %60 = vmatprep.subr.mxu0 0.0
    %61 = vmatpush1.msra.mxu0 %v48
    %62 = vmatprep.subr.mxu0 0.0
    %63 = vmatpush1.msra.mxu0 %v49
    %64 = vmatprep.subr.mxu0 0.0
    %65 = vmatpush1.msra.mxu0 %v50
    %66 = vmatprep.subr.mxu0 0.0
    %67 = vmatpush1.msra.mxu0 0.0
    %68 = vmatprep.subr.mxu0 0.0
    %69 = vmatpush1.msra.mxu0 0.0
    %70 = vmatprep.subr.mxu0 0.0
    %71 = vmatpush1.msra.mxu0 0.0
    %72 = vmatprep.subr.mxu0 0.0
    %73 = vmatpush1.msra.mxu0 0.0
    %74 = vmatprep.subr.mxu0 0.0
    %75 = vmatpush1.msra.mxu0 0.0
    %76 = vmatprep.subr.mxu0 0.0
    %77 = vmatpush1.msra.mxu0 0.0
    %78 = vmatprep.subr.mxu0 0.0
    %79 = vmatpush1.msra.mxu0 0.0
    %80 = vmatprep.subr.mxu0 0.0
    %81 = vmatpush1.msra.mxu0 0.0
    %82 = vmatprep.subr.mxu0 0.0
    %83 = vmatpush1.msra.mxu0 0.0
    %84 = vmatprep.subr.mxu0 0.0
    %85 = vmatpush1.msra.mxu0 0.0
    %86 = vmatprep.subr.mxu0 0.0
    %87 = vmatpush1.msra.mxu0 0.0
    %88 = vmatprep.subr.mxu0 0.0
    %89 = vmatpush1.msra.mxu0 0.0
    %90 = vmatprep.subr.mxu0 0.0
    %91 = vmatpush1.msra.mxu0 0.0
    %92 = vmatprep.subr.mxu0 0.0
    %93 = vmatpush1.msra.mxu0 0.0
    %94 = vmatprep.subr.mxu0 0.0
    %95 = vmatpush1.msra.mxu0 0.0
    %96 = vmatprep.subr.mxu0 0.0
    %97 = vmatpush1.msra.mxu0 0.0
    %98 = vmatprep.subr.mxu0 0.0
    %99 = vmatpush1.msra.mxu0 0.0
    %100 = vmatprep.subr.mxu0 0.0
    %101 = vmatpush1.msra.mxu0 0.0
    %102 = vmatprep.subr.mxu0 0.0
    %103 = vmatpush1.msra.mxu0 0.0
    %104 = vmatprep.subr.mxu0 0.0
    %105 = vmatpush1.msra.mxu0 0.0
    %106 = vmatprep.subr.mxu0 0.0
    %107 = vmatpush1.msra.mxu0 0.0
    %108 = vmatprep.subr.mxu0 0.0
    %109 = vmatpush1.msra.mxu0 0.0
    %110 = vmatprep.subr.mxu0 0.0
    %111 = vmatpush1.msra.mxu0 0.0
    %112 = vmatprep.subr.mxu0 0.0
    %113 = vmatpush1.msra.mxu0 0.0
    %114 = vmatprep.subr.mxu0 0.0
    %115 = vmatpush1.msra.mxu0 0.0
    %116 = vmatprep.subr.mxu0 0.0
    %117 = vmatpush1.msra.mxu0 0.0
    %118 = vmatprep.subr.mxu0 0.0
    %119 = vmatpush1.msra.mxu0 0.0
    %120 = vmatprep.subr.mxu0 0.0
    %121 = vmatpush1.msra.mxu0 0.0
    %122 = vmatprep.mubr.f32.mxu0 0.0
    %123 = vmatmul.mubr.f32.gmra.mrb[0].mxu0 %v56
    %v124 = vpop.f32.mrb[0].mxu0
    %v125 = vadd.f32 0.0, %v124
    %v126 = vpop.f32.mrb[0].mxu0
    %127 = vdwg.mxu0
    %v128 = vadd.f32 %v53, %v125
    %v129 = vxor.u32 %v128, 2147483648
    %v130 = vmul.f32 %v129, 1.442695
    %v131 = vpow.pop %v130
    %v132 = vadd.f32 %v131, 1.0
    %v133 = vrcp.pop %v132
    %v134 = vmul.f32 1.0, %v133
    %v135 = vtanh.pop %v128
    %137 = vrot.lane.b32.xlu0 %v52, 32
    %v138 = vpop.permute.xlu0 %137
    %v140 = vmul.f32 %v134, %v138
    %142 = vrot.lane.b32.xlu0 %v135, 64
    %v143 = vpop.permute.xlu0 %142
    %v145 = vmul.f32 %v134, %v143
    %147 = vrot.lane.b32.xlu0 %v145, 32
    %v148 = vpop.permute.xlu0 %147
    %v150 = vadd.f32 %v140, %v148
    %v151 = vtanh.pop %v150
    %153 = vrot.lane.b32.xlu0 %v151, 64
    %v154 = vpop.permute.xlu0 %153
    %v156 = vmul.f32 %v134, %v154
    %s157 = scalar_lea.vmem [#allocation4], 2
    %v158 = vld [vmem:[%s157] sm:$0x3]
    %160 = vrot.lane.b32.xlu0 %v156, 32
    %v161 = vpop.permute.xlu0 %160
    %v162 = vsel %vm54, %v161, 0
    %164 = vmatprep.subr.mxu0 0.0
    %165 = vmatpush1.msra.mxu0 %v47
    %166 = vmatprep.subr.mxu0 0.0
    %167 = vmatpush1.msra.mxu0 %v48
    %168 = vmatprep.subr.mxu0 0.0
    %169 = vmatpush1.msra.mxu0 %v49
    %170 = vmatprep.subr.mxu0 0.0
    %171 = vmatpush1.msra.mxu0 %v50
    %172 = vmatprep.subr.mxu0 0.0
    %173 = vmatpush1.msra.mxu0 0.0
    %174 = vmatprep.subr.mxu0 0.0
    %175 = vmatpush1.msra.mxu0 0.0
    %176 = vmatprep.subr.mxu0 0.0
    %177 = vmatpush1.msra.mxu0 0.0
    %178 = vmatprep.subr.mxu0 0.0
    %179 = vmatpush1.msra.mxu0 0.0
    %180 = vmatprep.subr.mxu0 0.0
    %181 = vmatpush1.msra.mxu0 0.0
    %182 = vmatprep.subr.mxu0 0.0
    %183 = vmatpush1.msra.mxu0 0.0
    %184 = vmatprep.subr.mxu0 0.0
    %185 = vmatpush1.msra.mxu0 0.0
    %186 = vmatprep.subr.mxu0 0.0
    %187 = vmatpush1.msra.mxu0 0.0
    %188 = vmatprep.subr.mxu0 0.0
    %189 = vmatpush1.msra.mxu0 0.0
    %190 = vmatprep.subr.mxu0 0.0
    %191 = vmatpush1.msra.mxu0 0.0
    %192 = vmatprep.subr.mxu0 0.0
    %193 = vmatpush1.msra.mxu0 0.0
    %194 = vmatprep.subr.mxu0 0.0
    %195 = vmatpush1.msra.mxu0 0.0
    %196 = vmatprep.subr.mxu0 0.0
    %197 = vmatpush1.msra.mxu0 0.0
    %198 = vmatprep.subr.mxu0 0.0
    %199 = vmatpush1.msra.mxu0 0.0
    %200 = vmatprep.subr.mxu0 0.0
    %201 = vmatpush1.msra.mxu0 0.0
    %202 = vmatprep.subr.mxu0 0.0
    %203 = vmatpush1.msra.mxu0 0.0
    %204 = vmatprep.subr.mxu0 0.0
    %205 = vmatpush1.msra.mxu0 0.0
    %206 = vmatprep.subr.mxu0 0.0
    %207 = vmatpush1.msra.mxu0 0.0
    %208 = vmatprep.subr.mxu0 0.0
    %209 = vmatpush1.msra.mxu0 0.0
    %210 = vmatprep.subr.mxu0 0.0
    %211 = vmatpush1.msra.mxu0 0.0
    %212 = vmatprep.subr.mxu0 0.0
    %213 = vmatpush1.msra.mxu0 0.0
    %214 = vmatprep.subr.mxu0 0.0
    %215 = vmatpush1.msra.mxu0 0.0
    %216 = vmatprep.subr.mxu0 0.0
    %217 = vmatpush1.msra.mxu0 0.0
    %218 = vmatprep.subr.mxu0 0.0
    %219 = vmatpush1.msra.mxu0 0.0
    %220 = vmatprep.subr.mxu0 0.0
    %221 = vmatpush1.msra.mxu0 0.0
    %222 = vmatprep.subr.mxu0 0.0
    %223 = vmatpush1.msra.mxu0 0.0
    %224 = vmatprep.subr.mxu0 0.0
    %225 = vmatpush1.msra.mxu0 0.0
    %226 = vmatprep.subr.mxu0 0.0
    %227 = vmatpush1.msra.mxu0 0.0
    %228 = vmatprep.mubr.f32.mxu0 0.0
    %229 = vmatmul.mubr.f32.gmra.mrb[0].mxu0 %v162
    %v230 = vpop.f32.mrb[0].mxu0
    %v231 = vadd.f32 0.0, %v230
    %v232 = vpop.f32.mrb[0].mxu0
    %233 = vdwg.mxu0
    %v234 = vadd.f32 %v158, %v231
    %v235 = vxor.u32 %v234, 2147483648
    %v236 = vmul.f32 %v235, 1.442695
    %v237 = vpow.pop %v236
    %v238 = vadd.f32 %v237, 1.0
    %v239 = vrcp.pop %v238
    %v240 = vmul.f32 1.0, %v239
    %v241 = vtanh.pop %v234
    %v242 = vmul.f32 %v240, %v150
    %244 = vrot.lane.b32.xlu0 %v241, 64
    %v245 = vpop.permute.xlu0 %244
    %v247 = vmul.f32 %v240, %v245
    %249 = vrot.lane.b32.xlu0 %v247, 32
    %v250 = vpop.permute.xlu0 %249
    %v252 = vadd.f32 %v242, %v250
    %v253 = vtanh.pop %v252
    %255 = vrot.lane.b32.xlu0 %v253, 64
    %v256 = vpop.permute.xlu0 %255
    %v258 = vmul.f32 %v240, %v256
    %s259 = scalar_lea.vmem [#allocation4], 4
    %v260 = vld [vmem:[%s259] sm:$0x3]
    %262 = vrot.lane.b32.xlu0 %v258, 32
    %v263 = vpop.permute.xlu0 %262
    %v264 = vsel %vm54, %v263, 0
    %266 = vmatprep.subr.mxu0 0.0
    %267 = vmatpush1.msra.mxu0 %v47
    %268 = vmatprep.subr.mxu0 0.0
    %269 = vmatpush1.msra.mxu0 %v48
    %270 = vmatprep.subr.mxu0 0.0
    %271 = vmatpush1.msra.mxu0 %v49
    %272 = vmatprep.subr.mxu0 0.0
    %273 = vmatpush1.msra.mxu0 %v50
    %274 = vmatprep.subr.mxu0 0.0
    %275 = vmatpush1.msra.mxu0 0.0
    %276 = vmatprep.subr.mxu0 0.0
    %277 = vmatpush1.msra.mxu0 0.0
    %278 = vmatprep.subr.mxu0 0.0
    %279 = vmatpush1.msra.mxu0 0.0
    %280 = vmatprep.subr.mxu0 0.0
    %281 = vmatpush1.msra.mxu0 0.0
    %282 = vmatprep.subr.mxu0 0.0
    %283 = vmatpush1.msra.mxu0 0.0
    %284 = vmatprep.subr.mxu0 0.0
    %285 = vmatpush1.msra.mxu0 0.0
    %286 = vmatprep.subr.mxu0 0.0
    %287 = vmatpush1.msra.mxu0 0.0
    %288 = vmatprep.subr.mxu0 0.0
    %289 = vmatpush1.msra.mxu0 0.0
    %290 = vmatprep.subr.mxu0 0.0
    %291 = vmatpush1.msra.mxu0 0.0
    %292 = vmatprep.subr.mxu0 0.0
    %293 = vmatpush1.msra.mxu0 0.0
    %294 = vmatprep.subr.mxu0 0.0
    %295 = vmatpush1.msra.mxu0 0.0
    %296 = vmatprep.subr.mxu0 0.0
    %297 = vmatpush1.msra.mxu0 0.0
    %298 = vmatprep.subr.mxu0 0.0
    %299 = vmatpush1.msra.mxu0 0.0
    %300 = vmatprep.subr.mxu0 0.0
    %301 = vmatpush1.msra.mxu0 0.0
    %302 = vmatprep.subr.mxu0 0.0
    %303 = vmatpush1.msra.mxu0 0.0
    %304 = vmatprep.subr.mxu0 0.0
    %305 = vmatpush1.msra.mxu0 0.0
    %306 = vmatprep.subr.mxu0 0.0
    %307 = vmatpush1.msra.mxu0 0.0
    %308 = vmatprep.subr.mxu0 0.0
    %309 = vmatpush1.msra.mxu0 0.0
    %310 = vmatprep.subr.mxu0 0.0
    %311 = vmatpush1.msra.mxu0 0.0
    %312 = vmatprep.subr.mxu0 0.0
    %313 = vmatpush1.msra.mxu0 0.0
    %314 = vmatprep.subr.mxu0 0.0
    %315 = vmatpush1.msra.mxu0 0.0
    %316 = vmatprep.subr.mxu0 0.0
    %317 = vmatpush1.msra.mxu0 0.0
    %318 = vmatprep.subr.mxu0 0.0
    %319 = vmatpush1.msra.mxu0 0.0
    %320 = vmatprep.subr.mxu0 0.0
    %321 = vmatpush1.msra.mxu0 0.0
    %322 = vmatprep.subr.mxu0 0.0
    %323 = vmatpush1.msra.mxu0 0.0
    %324 = vmatprep.subr.mxu0 0.0
    %325 = vmatpush1.msra.mxu0 0.0
    %326 = vmatprep.subr.mxu0 0.0
    %327 = vmatpush1.msra.mxu0 0.0
    %328 = vmatprep.subr.mxu0 0.0
    %329 = vmatpush1.msra.mxu0 0.0
    %330 = vmatprep.mubr.f32.mxu0 0.0
    %331 = vmatmul.mubr.f32.gmra.mrb[0].mxu0 %v264
    %v332 = vpop.f32.mrb[0].mxu0
    %v333 = vadd.f32 0.0, %v332
    %v334 = vpop.f32.mrb[0].mxu0
    %335 = vdwg.mxu0
    %v336 = vadd.f32 %v260, %v333
    %v337 = vxor.u32 %v336, 2147483648
    %v338 = vmul.f32 %v337, 1.442695
    %v339 = vpow.pop %v338
    %v340 = vadd.f32 %v339, 1.0
    %v341 = vrcp.pop %v340
    %v342 = vmul.f32 1.0, %v341
    %v343 = vtanh.pop %v336
    %v344 = vmul.f32 %v342, %v252
    %346 = vrot.lane.b32.xlu0 %v343, 64
    %v347 = vpop.permute.xlu0 %346
    %v349 = vmul.f32 %v342, %v347
    %351 = vrot.lane.b32.xlu0 %v349, 32
    %v352 = vpop.permute.xlu0 %351
    %v354 = vadd.f32 %v344, %v352
    %v355 = vtanh.pop %v354
    %357 = vrot.lane.b32.xlu0 %v355, 64
    %v358 = vpop.permute.xlu0 %357
    %v360 = vmul.f32 %v342, %v358
    %s361 = scalar_lea.vmem [#allocation4], 6
    %v362 = vld [vmem:[%s361] sm:$0x3]
    %364 = vrot.lane.b32.xlu0 %v360, 32
    %v365 = vpop.permute.xlu0 %364
    %v366 = vsel %vm54, %v365, 0
    %368 = vmatprep.subr.mxu0 0.0
    %369 = vmatpush1.msra.mxu0 %v47
    %370 = vmatprep.subr.mxu0 0.0
    %371 = vmatpush1.msra.mxu0 %v48
    %372 = vmatprep.subr.mxu0 0.0
    %373 = vmatpush1.msra.mxu0 %v49
    %374 = vmatprep.subr.mxu0 0.0
    %375 = vmatpush1.msra.mxu0 %v50
    %376 = vmatprep.subr.mxu0 0.0
    %377 = vmatpush1.msra.mxu0 0.0
    %378 = vmatprep.subr.mxu0 0.0
    %379 = vmatpush1.msra.mxu0 0.0
    %380 = vmatprep.subr.mxu0 0.0
    %381 = vmatpush1.msra.mxu0 0.0
    %382 = vmatprep.subr.mxu0 0.0
    %383 = vmatpush1.msra.mxu0 0.0
    %384 = vmatprep.subr.mxu0 0.0
    %385 = vmatpush1.msra.mxu0 0.0
    %386 = vmatprep.subr.mxu0 0.0
    %387 = vmatpush1.msra.mxu0 0.0
    %388 = vmatprep.subr.mxu0 0.0
    %389 = vmatpush1.msra.mxu0 0.0
    %390 = vmatprep.subr.mxu0 0.0
    %391 = vmatpush1.msra.mxu0 0.0
    %392 = vmatprep.subr.mxu0 0.0
    %393 = vmatpush1.msra.mxu0 0.0
    %394 = vmatprep.subr.mxu0 0.0
    %395 = vmatpush1.msra.mxu0 0.0
    %396 = vmatprep.subr.mxu0 0.0
    %397 = vmatpush1.msra.mxu0 0.0
    %398 = vmatprep.subr.mxu0 0.0
    %399 = vmatpush1.msra.mxu0 0.0
    %400 = vmatprep.subr.mxu0 0.0
    %401 = vmatpush1.msra.mxu0 0.0
    %402 = vmatprep.subr.mxu0 0.0
    %403 = vmatpush1.msra.mxu0 0.0
    %404 = vmatprep.subr.mxu0 0.0
    %405 = vmatpush1.msra.mxu0 0.0
    %406 = vmatprep.subr.mxu0 0.0
    %407 = vmatpush1.msra.mxu0 0.0
    %408 = vmatprep.subr.mxu0 0.0
    %409 = vmatpush1.msra.mxu0 0.0
    %410 = vmatprep.subr.mxu0 0.0
    %411 = vmatpush1.msra.mxu0 0.0
    %412 = vmatprep.subr.mxu0 0.0
    %413 = vmatpush1.msra.mxu0 0.0
    %414 = vmatprep.subr.mxu0 0.0
    %415 = vmatpush1.msra.mxu0 0.0
    %416 = vmatprep.subr.mxu0 0.0
    %417 = vmatpush1.msra.mxu0 0.0
    %418 = vmatprep.subr.mxu0 0.0
    %419 = vmatpush1.msra.mxu0 0.0
    %420 = vmatprep.subr.mxu0 0.0
    %421 = vmatpush1.msra.mxu0 0.0
    %422 = vmatprep.subr.mxu0 0.0
    %423 = vmatpush1.msra.mxu0 0.0
    %424 = vmatprep.subr.mxu0 0.0
    %425 = vmatpush1.msra.mxu0 0.0
    %426 = vmatprep.subr.mxu0 0.0
    %427 = vmatpush1.msra.mxu0 0.0
    %428 = vmatprep.subr.mxu0 0.0
    %429 = vmatpush1.msra.mxu0 0.0
    %430 = vmatprep.subr.mxu0 0.0
    %431 = vmatpush1.msra.mxu0 0.0
    %432 = vmatprep.mubr.f32.mxu0 0.0
    %433 = vmatmul.mubr.f32.gmra.mrb[0].mxu0 %v366
    %v434 = vpop.f32.mrb[0].mxu0
    %v435 = vadd.f32 0.0, %v434
    %v436 = vpop.f32.mrb[0].mxu0
    %437 = vdwg.mxu0
    %v438 = vadd.f32 %v362, %v435
    %v439 = vxor.u32 %v438, 2147483648
    %v440 = vmul.f32 %v439, 1.442695
    %v441 = vpow.pop %v440
    %v442 = vadd.f32 %v441, 1.0
    %v443 = vrcp.pop %v442
    %v444 = vmul.f32 1.0, %v443
    %v445 = vtanh.pop %v438
    %v446 = vmul.f32 %v444, %v354
    %448 = vrot.lane.b32.xlu0 %v445, 64
    %v449 = vpop.permute.xlu0 %448
    %v451 = vmul.f32 %v444, %v449
    %453 = vrot.lane.b32.xlu0 %v451, 32
    %v454 = vpop.permute.xlu0 %453
    %v456 = vadd.f32 %v446, %v454
    %v457 = vtanh.pop %v456
    %459 = vrot.lane.b32.xlu0 %v457, 64
    %v460 = vpop.permute.xlu0 %459
    %v462 = vmul.f32 %v444, %v460
    %s463 = scalar_lea.vmem [#allocation4], 8
    %v464 = vld [vmem:[%s463] sm:$0x3]
    %466 = vrot.lane.b32.xlu0 %v462, 32
    %v467 = vpop.permute.xlu0 %466
    %v468 = vsel %vm54, %v467, 0
    %470 = vmatprep.subr.mxu0 0.0
    %471 = vmatpush1.msra.mxu0 %v47
    %472 = vmatprep.subr.mxu0 0.0
    %473 = vmatpush1.msra.mxu0 %v48
    %474 = vmatprep.subr.mxu0 0.0
    %475 = vmatpush1.msra.mxu0 %v49
    %476 = vmatprep.subr.mxu0 0.0
    %477 = vmatpush1.msra.mxu0 %v50
    %478 = vmatprep.subr.mxu0 0.0
    %479 = vmatpush1.msra.mxu0 0.0
    %480 = vmatprep.subr.mxu0 0.0
    %481 = vmatpush1.msra.mxu0 0.0
    %482 = vmatprep.subr.mxu0 0.0
    %483 = vmatpush1.msra.mxu0 0.0
    %484 = vmatprep.subr.mxu0 0.0
    %485 = vmatpush1.msra.mxu0 0.0
    %486 = vmatprep.subr.mxu0 0.0
    %487 = vmatpush1.msra.mxu0 0.0
    %488 = vmatprep.subr.mxu0 0.0
    %489 = vmatpush1.msra.mxu0 0.0
    %490 = vmatprep.subr.mxu0 0.0
    %491 = vmatpush1.msra.mxu0 0.0
    %492 = vmatprep.subr.mxu0 0.0
    %493 = vmatpush1.msra.mxu0 0.0
    %494 = vmatprep.subr.mxu0 0.0
    %495 = vmatpush1.msra.mxu0 0.0
    %496 = vmatprep.subr.mxu0 0.0
    %497 = vmatpush1.msra.mxu0 0.0
    %498 = vmatprep.subr.mxu0 0.0
    %499 = vmatpush1.msra.mxu0 0.0
    %500 = vmatprep.subr.mxu0 0.0
    %501 = vmatpush1.msra.mxu0 0.0
    %502 = vmatprep.subr.mxu0 0.0
    %503 = vmatpush1.msra.mxu0 0.0
    %504 = vmatprep.subr.mxu0 0.0
    %505 = vmatpush1.msra.mxu0 0.0
    %506 = vmatprep.subr.mxu0 0.0
    %507 = vmatpush1.msra.mxu0 0.0
    %508 = vmatprep.subr.mxu0 0.0
    %509 = vmatpush1.msra.mxu0 0.0
    %510 = vmatprep.subr.mxu0 0.0
    %511 = vmatpush1.msra.mxu0 0.0
    %512 = vmatprep.subr.mxu0 0.0
    %513 = vmatpush1.msra.mxu0 0.0
    %514 = vmatprep.subr.mxu0 0.0
    %515 = vmatpush1.msra.mxu0 0.0
    %516 = vmatprep.subr.mxu0 0.0
    %517 = vmatpush1.msra.mxu0 0.0
    %518 = vmatprep.subr.mxu0 0.0
    %519 = vmatpush1.msra.mxu0 0.0
    %520 = vmatprep.subr.mxu0 0.0
    %521 = vmatpush1.msra.mxu0 0.0
    %522 = vmatprep.subr.mxu0 0.0
    %523 = vmatpush1.msra.mxu0 0.0
    %524 = vmatprep.subr.mxu0 0.0
    %525 = vmatpush1.msra.mxu0 0.0
    %526 = vmatprep.subr.mxu0 0.0
    %527 = vmatpush1.msra.mxu0 0.0
    %528 = vmatprep.subr.mxu0 0.0
    %529 = vmatpush1.msra.mxu0 0.0
    %530 = vmatprep.subr.mxu0 0.0
    %531 = vmatpush1.msra.mxu0 0.0
    %532 = vmatprep.subr.mxu0 0.0
    %533 = vmatpush1.msra.mxu0 0.0
    %534 = vmatprep.mubr.f32.mxu0 0.0
    %535 = vmatmul.mubr.f32.gmra.mrb[0].mxu0 %v468
    %v536 = vpop.f32.mrb[0].mxu0
    %v537 = vadd.f32 0.0, %v536
    %v538 = vpop.f32.mrb[0].mxu0
    %539 = vdwg.mxu0
    %v540 = vadd.f32 %v464, %v537
    %v541 = vxor.u32 %v540, 2147483648
    %v542 = vmul.f32 %v541, 1.442695
    %v543 = vpow.pop %v542
    %v544 = vadd.f32 %v543, 1.0
    %v545 = vrcp.pop %v544
    %v546 = vmul.f32 1.0, %v545
    %v547 = vtanh.pop %v540
    %v548 = vmul.f32 %v546, %v456
    %550 = vrot.lane.b32.xlu0 %v547, 64
    %v551 = vpop.permute.xlu0 %550
    %v553 = vmul.f32 %v546, %v551
    %555 = vrot.lane.b32.xlu0 %v553, 32
    %v556 = vpop.permute.xlu0 %555
    %v558 = vadd.f32 %v548, %v556
    %v559 = vtanh.pop %v558
    %561 = vrot.lane.b32.xlu0 %v559, 64
    %v562 = vpop.permute.xlu0 %561
    %v564 = vmul.f32 %v546, %v562
    %s565 = scalar_lea.vmem [#allocation4], 10
    %v566 = vld [vmem:[%s565] sm:$0x3]
    %568 = vrot.lane.b32.xlu0 %v564, 32
    %v569 = vpop.permute.xlu0 %568
    %v570 = vsel %vm54, %v569, 0
    %572 = vmatprep.subr.mxu0 0.0
    %573 = vmatpush1.msra.mxu0 %v47
    %574 = vmatprep.subr.mxu0 0.0
    %575 = vmatpush1.msra.mxu0 %v48
    %576 = vmatprep.subr.mxu0 0.0
    %577 = vmatpush1.msra.mxu0 %v49
    %578 = vmatprep.subr.mxu0 0.0
    %579 = vmatpush1.msra.mxu0 %v50
    %580 = vmatprep.subr.mxu0 0.0
    %581 = vmatpush1.msra.mxu0 0.0
    %582 = vmatprep.subr.mxu0 0.0
    %583 = vmatpush1.msra.mxu0 0.0
    %584 = vmatprep.subr.mxu0 0.0
    %585 = vmatpush1.msra.mxu0 0.0
    %586 = vmatprep.subr.mxu0 0.0
    %587 = vmatpush1.msra.mxu0 0.0
    %588 = vmatprep.subr.mxu0 0.0
    %589 = vmatpush1.msra.mxu0 0.0
    %590 = vmatprep.subr.mxu0 0.0
    %591 = vmatpush1.msra.mxu0 0.0
    %592 = vmatprep.subr.mxu0 0.0
    %593 = vmatpush1.msra.mxu0 0.0
    %594 = vmatprep.subr.mxu0 0.0
    %595 = vmatpush1.msra.mxu0 0.0
    %596 = vmatprep.subr.mxu0 0.0
    %597 = vmatpush1.msra.mxu0 0.0
    %598 = vmatprep.subr.mxu0 0.0
    %599 = vmatpush1.msra.mxu0 0.0
    %600 = vmatprep.subr.mxu0 0.0
    %601 = vmatpush1.msra.mxu0 0.0
    %602 = vmatprep.subr.mxu0 0.0
    %603 = vmatpush1.msra.mxu0 0.0
    %604 = vmatprep.subr.mxu0 0.0
    %605 = vmatpush1.msra.mxu0 0.0
    %606 = vmatprep.subr.mxu0 0.0
    %607 = vmatpush1.msra.mxu0 0.0
    %608 = vmatprep.subr.mxu0 0.0
    %609 = vmatpush1.msra.mxu0 0.0
    %610 = vmatprep.subr.mxu0 0.0
    %611 = vmatpush1.msra.mxu0 0.0
    %612 = vmatprep.subr.mxu0 0.0
    %613 = vmatpush1.msra.mxu0 0.0
    %614 = vmatprep.subr.mxu0 0.0
    %615 = vmatpush1.msra.mxu0 0.0
    %616 = vmatprep.subr.mxu0 0.0
    %617 = vmatpush1.msra.mxu0 0.0
    %618 = vmatprep.subr.mxu0 0.0
    %619 = vmatpush1.msra.mxu0 0.0
    %620 = vmatprep.subr.mxu0 0.0
    %621 = vmatpush1.msra.mxu0 0.0
    %622 = vmatprep.subr.mxu0 0.0
    %623 = vmatpush1.msra.mxu0 0.0
    %624 = vmatprep.subr.mxu0 0.0
    %625 = vmatpush1.msra.mxu0 0.0
    %626 = vmatprep.subr.mxu0 0.0
    %627 = vmatpush1.msra.mxu0 0.0
    %628 = vmatprep.subr.mxu0 0.0
    %629 = vmatpush1.msra.mxu0 0.0
    %630 = vmatprep.subr.mxu0 0.0
    %631 = vmatpush1.msra.mxu0 0.0
    %632 = vmatprep.subr.mxu0 0.0
    %633 = vmatpush1.msra.mxu0 0.0
    %634 = vmatprep.subr.mxu0 0.0
    %635 = vmatpush1.msra.mxu0 0.0
    %636 = vmatprep.mubr.f32.mxu0 0.0
    %637 = vmatmul.mubr.f32.gmra.mrb[0].mxu0 %v570
    %v638 = vpop.f32.mrb[0].mxu0
    %v639 = vadd.f32 0.0, %v638
    %v640 = vpop.f32.mrb[0].mxu0
    %641 = vdwg.mxu0
    %v642 = vadd.f32 %v566, %v639
    %v643 = vxor.u32 %v642, 2147483648
    %v644 = vmul.f32 %v643, 1.442695
    %v645 = vpow.pop %v644
    %v646 = vadd.f32 %v645, 1.0
    %v647 = vrcp.pop %v646
    %v648 = vmul.f32 1.0, %v647
    %v649 = vtanh.pop %v642
    %v650 = vmul.f32 %v648, %v558
    %652 = vrot.lane.b32.xlu0 %v649, 64
    %v653 = vpop.permute.xlu0 %652
    %v655 = vmul.f32 %v648, %v653
    %657 = vrot.lane.b32.xlu0 %v655, 32
    %v658 = vpop.permute.xlu0 %657
    %v660 = vadd.f32 %v650, %v658
    %v661 = vtanh.pop %v660
    %663 = vrot.lane.b32.xlu0 %v661, 64
    %v664 = vpop.permute.xlu0 %663
    %v666 = vmul.f32 %v648, %v664
    %s667 = scalar_lea.vmem [#allocation4], 12
    %v668 = vld [vmem:[%s667] sm:$0x3]
    %670 = vrot.lane.b32.xlu0 %v666, 32
    %v671 = vpop.permute.xlu0 %670
    %v672 = vsel %vm54, %v671, 0
    %674 = vmatprep.subr.mxu0 0.0
    %675 = vmatpush1.msra.mxu0 %v47
    %676 = vmatprep.subr.mxu0 0.0
    %677 = vmatpush1.msra.mxu0 %v48
    %678 = vmatprep.subr.mxu0 0.0
    %679 = vmatpush1.msra.mxu0 %v49
    %680 = vmatprep.subr.mxu0 0.0
    %681 = vmatpush1.msra.mxu0 %v50
    %682 = vmatprep.subr.mxu0 0.0
    %683 = vmatpush1.msra.mxu0 0.0
    %684 = vmatprep.subr.mxu0 0.0
    %685 = vmatpush1.msra.mxu0 0.0
    %686 = vmatprep.subr.mxu0 0.0
    %687 = vmatpush1.msra.mxu0 0.0
    %688 = vmatprep.subr.mxu0 0.0
    %689 = vmatpush1.msra.mxu0 0.0
    %690 = vmatprep.subr.mxu0 0.0
    %691 = vmatpush1.msra.mxu0 0.0
    %692 = vmatprep.subr.mxu0 0.0
    %693 = vmatpush1.msra.mxu0 0.0
    %694 = vmatprep.subr.mxu0 0.0
    %695 = vmatpush1.msra.mxu0 0.0
    %696 = vmatprep.subr.mxu0 0.0
    %697 = vmatpush1.msra.mxu0 0.0
    %698 = vmatprep.subr.mxu0 0.0
    %699 = vmatpush1.msra.mxu0 0.0
    %700 = vmatprep.subr.mxu0 0.0
    %701 = vmatpush1.msra.mxu0 0.0
    %702 = vmatprep.subr.mxu0 0.0
    %703 = vmatpush1.msra.mxu0 0.0
    %704 = vmatprep.subr.mxu0 0.0
    %705 = vmatpush1.msra.mxu0 0.0
    %706 = vmatprep.subr.mxu0 0.0
    %707 = vmatpush1.msra.mxu0 0.0
    %708 = vmatprep.subr.mxu0 0.0
    %709 = vmatpush1.msra.mxu0 0.0
    %710 = vmatprep.subr.mxu0 0.0
    %711 = vmatpush1.msra.mxu0 0.0
    %712 = vmatprep.subr.mxu0 0.0
    %713 = vmatpush1.msra.mxu0 0.0
    %714 = vmatprep.subr.mxu0 0.0
    %715 = vmatpush1.msra.mxu0 0.0
    %716 = vmatprep.subr.mxu0 0.0
    %717 = vmatpush1.msra.mxu0 0.0
    %718 = vmatprep.subr.mxu0 0.0
    %719 = vmatpush1.msra.mxu0 0.0
    %720 = vmatprep.subr.mxu0 0.0
    %721 = vmatpush1.msra.mxu0 0.0
    %722 = vmatprep.subr.mxu0 0.0
    %723 = vmatpush1.msra.mxu0 0.0
    %724 = vmatprep.subr.mxu0 0.0
    %725 = vmatpush1.msra.mxu0 0.0
    %726 = vmatprep.subr.mxu0 0.0
    %727 = vmatpush1.msra.mxu0 0.0
    %728 = vmatprep.subr.mxu0 0.0
    %729 = vmatpush1.msra.mxu0 0.0
    %730 = vmatprep.subr.mxu0 0.0
    %731 = vmatpush1.msra.mxu0 0.0
    %732 = vmatprep.subr.mxu0 0.0
    %733 = vmatpush1.msra.mxu0 0.0
    %734 = vmatprep.subr.mxu0 0.0
    %735 = vmatpush1.msra.mxu0 0.0
    %736 = vmatprep.subr.mxu0 0.0
    %737 = vmatpush1.msra.mxu0 0.0
    %738 = vmatprep.mubr.f32.mxu0 0.0
    %739 = vmatmul.mubr.f32.gmra.mrb[0].mxu0 %v672
    %v740 = vpop.f32.mrb[0].mxu0
    %v741 = vadd.f32 0.0, %v740
    %v742 = vpop.f32.mrb[0].mxu0
    %743 = vdwg.mxu0
    %v744 = vadd.f32 %v668, %v741
    %v745 = vxor.u32 %v744, 2147483648
    %v746 = vmul.f32 %v745, 1.442695
    %v747 = vpow.pop %v746
    %v748 = vadd.f32 %v747, 1.0
    %v749 = vrcp.pop %v748
    %v750 = vmul.f32 1.0, %v749
    %v751 = vtanh.pop %v744
    %v752 = vmul.f32 %v750, %v660
    %754 = vrot.lane.b32.xlu0 %v751, 64
    %v755 = vpop.permute.xlu0 %754
    %v757 = vmul.f32 %v750, %v755
    %759 = vrot.lane.b32.xlu0 %v757, 32
    %v760 = vpop.permute.xlu0 %759
    %v762 = vadd.f32 %v752, %v760
    %v763 = vtanh.pop %v762
    %765 = vrot.lane.b32.xlu0 %v763, 64
    %v766 = vpop.permute.xlu0 %765
    %v768 = vmul.f32 %v750, %v766
    %s769 = scalar_lea.vmem [#allocation4], 14
    %v770 = vld [vmem:[%s769] sm:$0x3]
    %772 = vrot.lane.b32.xlu0 %v768, 32
    %v773 = vpop.permute.xlu0 %772
    %v774 = vsel %vm54, %v773, 0
    %776 = vmatprep.subr.mxu0 0.0
    %777 = vmatpush1.msra.mxu0 %v47
    %778 = vmatprep.subr.mxu0 0.0
    %779 = vmatpush1.msra.mxu0 %v48
    %780 = vmatprep.subr.mxu0 0.0
    %781 = vmatpush1.msra.mxu0 %v49
    %782 = vmatprep.subr.mxu0 0.0
    %783 = vmatpush1.msra.mxu0 %v50
    %784 = vmatprep.subr.mxu0 0.0
    %785 = vmatpush1.msra.mxu0 0.0
    %786 = vmatprep.subr.mxu0 0.0
    %787 = vmatpush1.msra.mxu0 0.0
    %788 = vmatprep.subr.mxu0 0.0
    %789 = vmatpush1.msra.mxu0 0.0
    %790 = vmatprep.subr.mxu0 0.0
    %791 = vmatpush1.msra.mxu0 0.0
    %792 = vmatprep.subr.mxu0 0.0
    %793 = vmatpush1.msra.mxu0 0.0
    %794 = vmatprep.subr.mxu0 0.0
    %795 = vmatpush1.msra.mxu0 0.0
    %796 = vmatprep.subr.mxu0 0.0
    %797 = vmatpush1.msra.mxu0 0.0
    %798 = vmatprep.subr.mxu0 0.0
    %799 = vmatpush1.msra.mxu0 0.0
    %800 = vmatprep.subr.mxu0 0.0
    %801 = vmatpush1.msra.mxu0 0.0
    %802 = vmatprep.subr.mxu0 0.0
    %803 = vmatpush1.msra.mxu0 0.0
    %804 = vmatprep.subr.mxu0 0.0
    %805 = vmatpush1.msra.mxu0 0.0
    %806 = vmatprep.subr.mxu0 0.0
    %807 = vmatpush1.msra.mxu0 0.0
    %808 = vmatprep.subr.mxu0 0.0
    %809 = vmatpush1.msra.mxu0 0.0
    %810 = vmatprep.subr.mxu0 0.0
    %811 = vmatpush1.msra.mxu0 0.0
    %812 = vmatprep.subr.mxu0 0.0
    %813 = vmatpush1.msra.mxu0 0.0
    %814 = vmatprep.subr.mxu0 0.0
    %815 = vmatpush1.msra.mxu0 0.0
    %816 = vmatprep.subr.mxu0 0.0
    %817 = vmatpush1.msra.mxu0 0.0
    %818 = vmatprep.subr.mxu0 0.0
    %819 = vmatpush1.msra.mxu0 0.0
    %820 = vmatprep.subr.mxu0 0.0
    %821 = vmatpush1.msra.mxu0 0.0
    %822 = vmatprep.subr.mxu0 0.0
    %823 = vmatpush1.msra.mxu0 0.0
    %824 = vmatprep.subr.mxu0 0.0
    %825 = vmatpush1.msra.mxu0 0.0
    %826 = vmatprep.subr.mxu0 0.0
    %827 = vmatpush1.msra.mxu0 0.0
    %828 = vmatprep.subr.mxu0 0.0
    %829 = vmatpush1.msra.mxu0 0.0
    %830 = vmatprep.subr.mxu0 0.0
    %831 = vmatpush1.msra.mxu0 0.0
    %832 = vmatprep.subr.mxu0 0.0
    %833 = vmatpush1.msra.mxu0 0.0
    %834 = vmatprep.subr.mxu0 0.0
    %835 = vmatpush1.msra.mxu0 0.0
    %836 = vmatprep.subr.mxu0 0.0
    %837 = vmatpush1.msra.mxu0 0.0
    %838 = vmatprep.subr.mxu0 0.0
    %839 = vmatpush1.msra.mxu0 0.0
    %840 = vmatprep.mubr.f32.mxu0 0.0
    %841 = vmatmul.mubr.f32.gmra.mrb[0].mxu0 %v774
    %v842 = vpop.f32.mrb[0].mxu0
    %v843 = vadd.f32 0.0, %v842
    %v844 = vpop.f32.mrb[0].mxu0
    %845 = vdwg.mxu0
    %v846 = vadd.f32 %v770, %v843
    %v847 = vxor.u32 %v846, 2147483648
    %v848 = vmul.f32 %v847, 1.442695
    %v849 = vpow.pop %v848
    %v850 = vadd.f32 %v849, 1.0
    %v851 = vrcp.pop %v850
    %v852 = vmul.f32 1.0, %v851
    %v853 = vtanh.pop %v846
    %v854 = vmul.f32 %v852, %v762
    %856 = vrot.lane.b32.xlu0 %v853, 64
    %v857 = vpop.permute.xlu0 %856
    %v859 = vmul.f32 %v852, %v857
    %861 = vrot.lane.b32.xlu0 %v859, 32
    %v862 = vpop.permute.xlu0 %861
    %v864 = vadd.f32 %v854, %v862
    %v865 = vtanh.pop %v864
    %867 = vrot.lane.b32.xlu0 %v865, 64
    %v868 = vpop.permute.xlu0 %867
    %v870 = vmul.f32 %v852, %v868
    %872 = vrot.lane.b32.xlu0 %v870, 32
    %v873 = vpop.permute.xlu0 %872
    %vm875 = vcmask 254976
    %876 = vst.msk [vmem:[#allocation2] sm:$0x3] %vm875, %v873
    %878 = vrot.lane.b32.xlu0 %v864, 96
    %v879 = vpop.permute.xlu0 %878
    %881 = vst.msk [vmem:[#allocation3] sm:$0x3] %vm875, %v879
    %889 = vst.msk [vmem:[#allocation9] sm:$0x3] %vm875, %v161
    %890 = vst.msk [vmem:[#allocation9 + $0x2] sm:$0x3] %vm875, %v263
    %891 = vst.msk [vmem:[#allocation9 + $0x4] sm:$0x3] %vm875, %v365
    %892 = vst.msk [vmem:[#allocation9 + $0x6] sm:$0x3] %vm875, %v467
    %893 = vst.msk [vmem:[#allocation9 + $0x8] sm:$0x3] %vm875, %v569
    %894 = vst.msk [vmem:[#allocation9 + $0xa] sm:$0x3] %vm875, %v671
    %895 = vst.msk [vmem:[#allocation9 + $0xc] sm:$0x3] %vm875, %v773
    %896 = vst.msk [vmem:[#allocation9 + $0xe] sm:$0x3] %vm875, %v873
    // Predicated region
    $region22: #{tpu_custom_call.1} parent=1 // pred_check
      _
    $region23: #{tpu_custom_call.1} parent=1 // pred_check_branch
      %898 = sbr.rel (0) target = $region25
    $region24: #{tpu_custom_call.1} parent=1 // pred_region
      %s900 = ssub.s32 256, 256
      %901 = vsyncadd [#allocation6], %s900
      %s902 = sshll.u32 [#allocation9], 4
      %s903 = int_to_ptr.vmem [resolvable:$true] %s902
      %908 = dma.vmem_to_hbm [thread:$0]  %s903, 256, %s2, [#allocation6], 32, 32, 2
    $region25: #{tpu_custom_call.1} parent=1 // pred_fallthru
      _
    // Predicated region
    $region26: #{tpu_custom_call.1} parent=1 // pred_check
      _
    $region27: #{tpu_custom_call.1} parent=1 // pred_check_branch
      %910 = sbr.rel (0) target = $region29
    $region28: #{tpu_custom_call.1} parent=1 // pred_region
      %911 = dma.done [#allocation6], 256
    $region29: #{tpu_custom_call.1} parent=1 // pred_fallthru
      _
    %912 = vsyncpa [#allocation5], 1
    %913 = vsyncpa [#allocation8], 1
    %914 = vsyncpa [#allocation6], 1

</llo_original>
